<compile_context>
chip_gen: v7x
topology: tpu7x:2x2x1
jax: 0.10.0
libtpu: 0.0.40
codegen_flags: <defaults>
</compile_context>

<pallas_src>
import functools

import jax
import jax.numpy as jnp
from jax.experimental import pallas as pl
from jax.experimental.pallas import tpu as pltpu

_LANE = 128          # vreg lane width
_ROW_ALIGN = 16      # bf16 packs 16 rows per sublane group


def _round_up(x, m):
    return ((x + m - 1) // m) * m


def _leaky_relu(x, slope=0.2):
    return jnp.where(x > 0, x, slope * x)


# ---------------------------------------------------------------------------
# Kernels
# ---------------------------------------------------------------------------

def _generator_kernel_resident(z_ref, w1_ref, b1_ref, w2_ref, b2_ref,
                               w3_ref, b3_ref, o_ref):
    """All weights resident in VMEM; one batch tile per grid step."""
    z = z_ref[...].astype(w1_ref.dtype)  # f32 -> compute dtype on the VPU

    h1 = jnp.dot(z, w1_ref[...], preferred_element_type=jnp.float32) + b1_ref[...]
    h1 = _leaky_relu(h1)

    h2 = jnp.dot(h1.astype(w2_ref.dtype), w2_ref[...],
                 preferred_element_type=jnp.float32) + b2_ref[...]
    h2 = _leaky_relu(h2)

    h3 = jnp.dot(h2.astype(w3_ref.dtype), w3_ref[...],
                 preferred_element_type=jnp.float32) + b3_ref[...]
    o_ref[...] = jnp.tanh(h3).astype(o_ref.dtype)


def _generator_kernel_ktiled(n_kt, k_tile, z_ref, w1_ref, b1_ref, w2_ref,
                             b2_ref, w3_ref, b3_ref, o_ref, h1_scr, h2_scr):
    """w2 streamed in K-chunks along an "arbitrary" reduction grid axis.

    Grid = (batch_tiles, n_kt); h1 is computed once per batch tile (k == 0),
    stored chunked in VMEM scratch, and h2 accumulates in f32 scratch.
    """
    k = pl.program_id(1)

    @pl.when(k == 0)
    def _():
        z = z_ref[...].astype(w1_ref.dtype)
        h1 = _leaky_relu(
            jnp.dot(z, w1_ref[...], preferred_element_type=jnp.float32)
            + b1_ref[...])
        for j in range(n_kt):  # static unroll: store K-chunks of h1
            h1_scr[j] = h1[:, j * k_tile:(j + 1) * k_tile]
        h2_scr[...] = jnp.zeros_like(h2_scr)

    h2_scr[...] += jnp.dot(h1_scr[k].astype(w2_ref.dtype), w2_ref[...],
                           preferred_element_type=jnp.float32)

    @pl.when(k == n_kt - 1)
    def _():
        h2 = _leaky_relu(h2_scr[...] + b2_ref[...])
        h3 = jnp.dot(h2.astype(w3_ref.dtype), w3_ref[...],
                     preferred_element_type=jnp.float32) + b3_ref[...]
        o_ref[...] = jnp.tanh(h3).astype(o_ref.dtype)


# ---------------------------------------------------------------------------
# Wrappers
# ---------------------------------------------------------------------------

def prepare_params(params, *, compute_dtype=jnp.bfloat16):
    """One-time weight prep (hoisted out of the per-call path).

    Transposes PyTorch-convention (out,in) weights to (in,out), zero-pads
    feature dims to lane-dense multiples of 128 and casts matmul operands to
    the compute dtype.  Biases stay f32, shape (1, padded_out).
    """
    input_dim = params["w1"].shape[1]
    hidden_dim = params["w1"].shape[0]
    output_dim = params["w3"].shape[0]

    d_in = _round_up(input_dim, _LANE)
    d_h = _round_up(hidden_dim, _LANE)
    d_out = _round_up(output_dim, _LANE)

    def pad2(a, rows, cols):
        return jnp.pad(a, ((0, rows - a.shape[0]), (0, cols - a.shape[1])))

    prepped = {
        "w1t": pad2(params["w1"].T, d_in, d_h).astype(compute_dtype),
        "w2t": pad2(params["w2"].T, d_h, d_h).astype(compute_dtype),
        "w3t": pad2(params["w3"].T, d_h, d_out).astype(compute_dtype),
        "b1": pad2(params["b1"].reshape(1, -1), 1, d_h).astype(jnp.float32),
        "b2": pad2(params["b2"].reshape(1, -1), 1, d_h).astype(jnp.float32),
        "b3": pad2(params["b3"].reshape(1, -1), 1, d_out).astype(jnp.float32),
    }
    meta = dict(input_dim=input_dim, hidden_dim=hidden_dim,
                output_dim=output_dim, d_in=d_in, d_h=d_h, d_out=d_out,
                compute_dtype=jnp.dtype(compute_dtype))
    return prepped, meta


def _default_batch_tile(batch):
    if batch <= 256:
        return _round_up(batch, _ROW_ALIGN)  # single grid step, no per-step overhead
    kind = ""
    try:
        kind = jax.devices()[0].device_kind.lower()
    except Exception:
        pass
    if "v5 lite" in kind or "v5e" in kind:
        return 128   # 4x128^2 MXU already full; tighter VMEM
    if "v6" in kind:
        return 512   # single TC; fewer, bigger steps -> closer to HBM roofline
    return 256       # v7x & others: >=2 parallel steps feed both TensorCores


def generator_forward(z, prepped, meta, *, batch_tile=None, k_tile=None,
                      out_dtype=jnp.float32):
    """z: (B, input_dim) float32.  prepped/meta from prepare_params()."""
    B, input_dim = z.shape
    assert input_dim == meta["input_dim"], "z feature dim mismatch"
    d_in, d_h, d_out = meta["d_in"], meta["d_h"], meta["d_out"]
    output_dim = meta["output_dim"]
    w_itemsize = meta["compute_dtype"].itemsize
    out_itemsize = jnp.dtype(out_dtype).itemsize

    # Batch tiling (16-row aligned for bf16 sublane packing).
    if batch_tile is None:
        batch_tile = _default_batch_tile(B)
    batch_tile = _round_up(max(batch_tile, _ROW_ALIGN), _ROW_ALIGN)
    b_pad = _round_up(B, batch_tile)
    n_bt = b_pad // batch_tile

    # z stays f32 in HBM; pad only when actually needed (cast happens in-kernel).
    if b_pad != B or d_in != input_dim:
        z_p = jnp.pad(z, ((0, b_pad - B), (0, d_in - input_dim)))
    else:
        z_p = z

    # K-tiling of w2 for large hidden dims (keeps VMEM bounded on v7x's 64 MiB).
    if k_tile is None and d_h >= 2048:
        k_tile = 512
    use_ktiled = k_tile is not None and k_tile < d_h
    if use_ktiled:
        k_tile = _round_up(min(k_tile, d_h), _LANE)
        while d_h % k_tile != 0:
            k_tile -= _LANE
        n_kt = d_h // k_tile

    # Advisory cost estimate for the XLA scheduler.
    flops = 2 * b_pad * (d_in * d_h + d_h * d_h + d_h * d_out)
    bytes_accessed = (b_pad * d_in * 4
                      + (d_in * d_h + d_h * d_h + d_h * d_out) * w_itemsize
                      + (2 * d_h + d_out) * 4
                      + b_pad * d_out * out_itemsize)
    cost = pl.CostEstimate(flops=flops, transcendentals=b_pad * d_out,
                           bytes_accessed=bytes_accessed)

    # Explicit VMEM budget: single-buffered resident weights + double-buffered
    # streamed tiles + f32 intermediates/scratch, 2x headroom, capped at 64 MiB.
    if use_ktiled:
        weight_bytes = (d_in * d_h + 2 * k_tile * d_h + d_h * d_out) * w_itemsize
        scratch_bytes = 2 * batch_tile * d_h * 4
    else:
        weight_bytes = (d_in * d_h + d_h * d_h + d_h * d_out) * w_itemsize
        scratch_bytes = 0
    bias_bytes = (2 * d_h + d_out) * 4
    stream_bytes = 2 * batch_tile * (d_in * 4 + d_out * out_itemsize)
    interm_bytes = batch_tile * (2 * d_h + d_out) * 4
    need = weight_bytes + bias_bytes + stream_bytes + interm_bytes + scratch_bytes
    vmem_limit = int(min(max(2 * need, 32 * 2 ** 20), 64 * 2 ** 20))

    args = (z_p, prepped["w1t"], prepped["b1"], prepped["w2t"], prepped["b2"],
            prepped["w3t"], prepped["b3"])

    if not use_ktiled:
        const = lambda i: (0, 0)
        resident = lambda shape: pl.BlockSpec(shape, const,
                                              pipeline_mode=pl.Buffered(1))
        out_p = pl.pallas_call(
            _generator_kernel_resident,
            out_shape=jax.ShapeDtypeStruct((b_pad, d_out), out_dtype),
            grid_spec=pltpu.PrefetchScalarGridSpec(
                num_scalar_prefetch=0,
                grid=(n_bt,),
                in_specs=[
                    pl.BlockSpec((batch_tile, d_in), lambda i: (i, 0)),  # z tile
                    resident((d_in, d_h)),    # w1^T
                    resident((1, d_h)),       # b1
                    resident((d_h, d_h)),     # w2^T
                    resident((1, d_h)),       # b2
                    resident((d_h, d_out)),   # w3^T
                    resident((1, d_out)),     # b3
                ],
                out_specs=pl.BlockSpec((batch_tile, d_out), lambda i: (i, 0)),
            ),
            compiler_params=pltpu.CompilerParams(
                dimension_semantics=("parallel",),
                vmem_limit_bytes=vmem_limit),
            cost_estimate=cost,
        )(*args)
    else:
        const = lambda i, k: (0, 0)
        resident = lambda shape: pl.BlockSpec(shape, const,
                                              pipeline_mode=pl.Buffered(1))
        out_p = pl.pallas_call(
            functools.partial(_generator_kernel_ktiled, n_kt, k_tile),
            out_shape=jax.ShapeDtypeStruct((b_pad, d_out), out_dtype),
            grid_spec=pltpu.PrefetchScalarGridSpec(
                num_scalar_prefetch=0,
                grid=(n_bt, n_kt),
                in_specs=[
                    pl.BlockSpec((batch_tile, d_in), lambda i, k: (i, 0)),  # z tile
                    resident((d_in, d_h)),                                  # w1^T
                    resident((1, d_h)),                                     # b1
                    pl.BlockSpec((k_tile, d_h), lambda i, k: (k, 0)),       # w2^T K-chunk
                    resident((1, d_h)),                                     # b2
                    resident((d_h, d_out)),                                 # w3^T
                    resident((1, d_out)),                                   # b3
                ],
                out_specs=pl.BlockSpec((batch_tile, d_out), lambda i, k: (i, 0)),
                scratch_shapes=[
                    pltpu.VMEM((n_kt, batch_tile, k_tile), jnp.float32),  # h1 chunks
                    pltpu.VMEM((batch_tile, d_h), jnp.float32),           # h2 accum
                ],
            ),
            compiler_params=pltpu.CompilerParams(
                dimension_semantics=("parallel", "arbitrary"),
                vmem_limit_bytes=vmem_limit),
            cost_estimate=cost,
        )(*args)

    # Strip batch/feature padding only when there is any.
    if b_pad != B or d_out != output_dim:
        out_p = out_p[:B, :output_dim]
    return out_p


# ---------------------------------------------------------------------------
# Reference & test
# ---------------------------------------------------------------------------

def init_params(key, input_dim, hidden_dim, output_dim):
    """Deterministic synthetic init, PyTorch nn.Linear convention W:(out,in)."""
    ks = jax.random.split(key, 6)
    s1 = 1.0 / jnp.sqrt(input_dim)
    s2 = 1.0 / jnp.sqrt(hidden_dim)
    return {
        "w1": jax.random.uniform(ks[0], (hidden_dim, input_dim), jnp.float32, -s1, s1),
        "b1": jax.random.uniform(ks[1], (hidden_dim,), jnp.float32, -s1, s1),
        "w2": jax.random.uniform(ks[2], (hidden_dim, hidden_dim), jnp.float32, -s2, s2),
        "b2": jax.random.uniform(ks[3], (hidden_dim,), jnp.float32, -s2, s2),
        "w3": jax.random.uniform(ks[4], (output_dim, hidden_dim), jnp.float32, -s2, s2),
        "b3": jax.random.uniform(ks[5], (output_dim,), jnp.float32, -s2, s2),
    }


def generator_ref(z, params):
    """Pure-JAX f32 reference matching PyTorch semantics."""
    h = z @ params["w1"].T + params["b1"]
    h = jnp.where(h > 0, h, 0.2 * h)
    h = h @ params["w2"].T + params["b2"]
    h = jnp.where(h > 0, h, 0.2 * h)
    h = h @ params["w3"].T + params["b3"]
    return jnp.tanh(h)


if __name__ == "__main__":
    key = jax.random.PRNGKey(0)
    k_z, k_p, k_z2, k_p2 = jax.random.split(key, 4)

    # Small config (matches the module at toy sizes): single grid step,
    # resident-weight path, features padded 32/64 -> 128 lanes.
    batch, input_dim, hidden_dim, output_dim = 16, 32, 64, 32
    z = jax.random.normal(k_z, (batch, input_dim), jnp.float32)
    params = init_params(k_p, input_dim, hidden_dim, output_dim)
    prepped, meta = prepare_params(params)

    out = jax.block_until_ready(generator_forward(z, prepped, meta))
    ref = generator_ref(z, params)
    assert out.shape == (batch, output_dim)
    err = float(jnp.max(jnp.abs(out - ref)))
    assert err < 2e-2, f"mismatch vs reference: max abs err {err}"

    # Larger, non-aligned config: 2-step "parallel" batch grid plus the
    # K-tiled w2 reduction path (k_tile forced small so the path is exercised),
    # batch/feature padding 300 -> 512 rows, 100/784 -> 128/896 lanes.
    batch2, in2, hid2, od2 = 300, 100, 256, 784
    z2 = jax.random.normal(k_z2, (batch2, in2), jnp.float32)
    params2 = init_params(k_p2, in2, hid2, od2)
    prepped2, meta2 = prepare_params(params2)
    y2 = jax.block_until_ready(
        generator_forward(z2, prepped2, meta2, batch_tile=256, k_tile=128))
    ref2 = generator_ref(z2, params2)
    assert y2.shape == (batch2, od2)
    err2 = float(jnp.max(jnp.abs(y2 - ref2)))
    assert err2 < 5e-2, f"mismatch vs reference (large): max abs err {err2}"

    print("KERNEL_OK")
</pallas_src>

<mosaic_0001>
module attributes {stable_mosaic.version = 11 : i64} {
  func.func @_generator_kernel_resident(%arg0: i32, %arg1: memref<16x128xf32, #tpu.memory_space<vmem>>, %arg2: memref<128x128xbf16, #tpu.memory_space<vmem>>, %arg3: memref<1x128xf32, #tpu.memory_space<vmem>>, %arg4: memref<128x128xbf16, #tpu.memory_space<vmem>>, %arg5: memref<1x128xf32, #tpu.memory_space<vmem>>, %arg6: memref<128x128xbf16, #tpu.memory_space<vmem>>, %arg7: memref<1x128xf32, #tpu.memory_space<vmem>>, %arg8: memref<16x128xf32, #tpu.memory_space<vmem>>) attributes {dimension_semantics = [#tpu.dimension_semantics<parallel>], iteration_bounds = array<i64: 1>, scalar_prefetch = 0 : i64, scratch_operands = 0 : i64, tpu.core_type = #tpu.core_type<tc>, window_params = [{transform_indices = @transform_0, window_bounds = array<i64: 16, 128>}, {pipeline_mode = #tpu.pipeline_mode<synchronous>, transform_indices = @transform_1, window_bounds = array<i64: 128, 128>}, {pipeline_mode = #tpu.pipeline_mode<synchronous>, transform_indices = @transform_2, window_bounds = array<i64: 1, 128>}, {pipeline_mode = #tpu.pipeline_mode<synchronous>, transform_indices = @transform_3, window_bounds = array<i64: 128, 128>}, {pipeline_mode = #tpu.pipeline_mode<synchronous>, transform_indices = @transform_4, window_bounds = array<i64: 1, 128>}, {pipeline_mode = #tpu.pipeline_mode<synchronous>, transform_indices = @transform_5, window_bounds = array<i64: 128, 128>}, {pipeline_mode = #tpu.pipeline_mode<synchronous>, transform_indices = @transform_6, window_bounds = array<i64: 1, 128>}, {transform_indices = @transform_7, window_bounds = array<i64: 16, 128>}]} {
    %c0 = arith.constant 0 : index
    %c0_0 = arith.constant 0 : index
    %0 = vector.load %arg1[%c0, %c0_0] : memref<16x128xf32, #tpu.memory_space<vmem>>, vector<16x128xf32>
    %1 = arith.truncf %0 : vector<16x128xf32> to vector<16x128xbf16>
    %c0_1 = arith.constant 0 : index
    %c0_2 = arith.constant 0 : index
    %2 = vector.load %arg2[%c0_1, %c0_2] : memref<128x128xbf16, #tpu.memory_space<vmem>>, vector<128x128xbf16>
    %cst = arith.constant dense<0.000000e+00> : vector<16x128xf32>
    %3 = tpu.matmul %1, %2, %cst {dimension_numbers = #tpu.dot_dimension_numbers<[1], [0], [0], [1], [0, 0, 1, 1], [], []>} : vector<16x128xbf16>, vector<128x128xbf16>, vector<16x128xf32> -> vector<16x128xf32>
    %c0_3 = arith.constant 0 : index
    %c0_4 = arith.constant 0 : index
    %4 = vector.load %arg3[%c0_3, %c0_4] : memref<1x128xf32, #tpu.memory_space<vmem>>, vector<1x128xf32>
    %5 = vector.broadcast %4 : vector<1x128xf32> to vector<16x128xf32>
    %6 = arith.addf %3, %5 : vector<16x128xf32>
    %cst_5 = arith.constant 0.000000e+00 : f32
    %7 = vector.broadcast %cst_5 : f32 to vector<16x128xf32>
    %8 = arith.cmpf ogt, %6, %7 : vector<16x128xf32>
    %cst_6 = arith.constant 2.000000e-01 : f32
    %9 = vector.broadcast %cst_6 : f32 to vector<16x128xf32>
    %10 = arith.mulf %9, %6 : vector<16x128xf32>
    %11 = arith.select %8, %6, %10 : vector<16x128xi1>, vector<16x128xf32>
    %12 = arith.truncf %11 : vector<16x128xf32> to vector<16x128xbf16>
    %c0_7 = arith.constant 0 : index
    %c0_8 = arith.constant 0 : index
    %13 = vector.load %arg4[%c0_7, %c0_8] : memref<128x128xbf16, #tpu.memory_space<vmem>>, vector<128x128xbf16>
    %cst_9 = arith.constant dense<0.000000e+00> : vector<16x128xf32>
    %14 = tpu.matmul %12, %13, %cst_9 {dimension_numbers = #tpu.dot_dimension_numbers<[1], [0], [0], [1], [0, 0, 1, 1], [], []>} : vector<16x128xbf16>, vector<128x128xbf16>, vector<16x128xf32> -> vector<16x128xf32>
    %c0_10 = arith.constant 0 : index
    %c0_11 = arith.constant 0 : index
    %15 = vector.load %arg5[%c0_10, %c0_11] : memref<1x128xf32, #tpu.memory_space<vmem>>, vector<1x128xf32>
    %16 = vector.broadcast %15 : vector<1x128xf32> to vector<16x128xf32>
    %17 = arith.addf %14, %16 : vector<16x128xf32>
    %cst_12 = arith.constant 0.000000e+00 : f32
    %18 = vector.broadcast %cst_12 : f32 to vector<16x128xf32>
    %19 = arith.cmpf ogt, %17, %18 : vector<16x128xf32>
    %cst_13 = arith.constant 2.000000e-01 : f32
    %20 = vector.broadcast %cst_13 : f32 to vector<16x128xf32>
    %21 = arith.mulf %20, %17 : vector<16x128xf32>
    %22 = arith.select %19, %17, %21 : vector<16x128xi1>, vector<16x128xf32>
    %23 = arith.truncf %22 : vector<16x128xf32> to vector<16x128xbf16>
    %c0_14 = arith.constant 0 : index
    %c0_15 = arith.constant 0 : index
    %24 = vector.load %arg6[%c0_14, %c0_15] : memref<128x128xbf16, #tpu.memory_space<vmem>>, vector<128x128xbf16>
    %cst_16 = arith.constant dense<0.000000e+00> : vector<16x128xf32>
    %25 = tpu.matmul %23, %24, %cst_16 {dimension_numbers = #tpu.dot_dimension_numbers<[1], [0], [0], [1], [0, 0, 1, 1], [], []>} : vector<16x128xbf16>, vector<128x128xbf16>, vector<16x128xf32> -> vector<16x128xf32>
    %c0_17 = arith.constant 0 : index
    %c0_18 = arith.constant 0 : index
    %26 = vector.load %arg7[%c0_17, %c0_18] : memref<1x128xf32, #tpu.memory_space<vmem>>, vector<1x128xf32>
    %27 = vector.broadcast %26 : vector<1x128xf32> to vector<16x128xf32>
    %28 = arith.addf %25, %27 : vector<16x128xf32>
    %29 = math.tanh %28 : vector<16x128xf32>
    %c0_19 = arith.constant 0 : index
    %c0_20 = arith.constant 0 : index
    %30 = vector.load %arg8[%c0_19, %c0_20] : memref<16x128xf32, #tpu.memory_space<vmem>>, vector<16x128xf32>
    tpu.vector_store %arg8[%c0_19, %c0_20], %29 {strides = array<i32>} : memref<16x128xf32, #tpu.memory_space<vmem>>, vector<16x128xf32>,
    return
  }
  func.func @transform_0(%arg0: i32) -> (i32, i32) {
    %c0_i32 = arith.constant 0 : i32
    %c0_i32_0 = arith.constant 0 : i32
    return %arg0, %c0_i32 : i32, i32
  }
  func.func @transform_1(%arg0: i32) -> (i32, i32) {
    %c0_i32 = arith.constant 0 : i32
    %c0_i32_0 = arith.constant 0 : i32
    %c0_i32_1 = arith.constant 0 : i32
    return %c0_i32, %c0_i32_0 : i32, i32
  }
  func.func @transform_2(%arg0: i32) -> (i32, i32) {
    %c0_i32 = arith.constant 0 : i32
    %c0_i32_0 = arith.constant 0 : i32
    %c0_i32_1 = arith.constant 0 : i32
    return %c0_i32, %c0_i32_0 : i32, i32
  }
  func.func @transform_3(%arg0: i32) -> (i32, i32) {
    %c0_i32 = arith.constant 0 : i32
    %c0_i32_0 = arith.constant 0 : i32
    %c0_i32_1 = arith.constant 0 : i32
    return %c0_i32, %c0_i32_0 : i32, i32
  }
  func.func @transform_4(%arg0: i32) -> (i32, i32) {
    %c0_i32 = arith.constant 0 : i32
    %c0_i32_0 = arith.constant 0 : i32
    %c0_i32_1 = arith.constant 0 : i32
    return %c0_i32, %c0_i32_0 : i32, i32
  }
  func.func @transform_5(%arg0: i32) -> (i32, i32) {
    %c0_i32 = arith.constant 0 : i32
    %c0_i32_0 = arith.constant 0 : i32
    %c0_i32_1 = arith.constant 0 : i32
    return %c0_i32, %c0_i32_0 : i32, i32
  }
  func.func @transform_6(%arg0: i32) -> (i32, i32) {
    %c0_i32 = arith.constant 0 : i32
    %c0_i32_0 = arith.constant 0 : i32
    %c0_i32_1 = arith.constant 0 : i32
    return %c0_i32, %c0_i32_0 : i32, i32
  }
  func.func @transform_7(%arg0: i32) -> (i32, i32) {
    %c0_i32 = arith.constant 0 : i32
    %c0_i32_0 = arith.constant 0 : i32
    return %arg0, %c0_i32 : i32, i32
  }
}

</mosaic_0001>

<llo_original>
// kernel: tpu_custom_call.1
$region0: #{tpu_custom_call.1}
  #allocation0 [shape = 'u32[]', space=smem, size = 0x4, offset = 0x4, fixed_abs, tag = 'smem constant byte address 0x4 - core index']
  #allocation1 [shape = 'u32[144,128]{1,0:T(1,128)}', space=vmem, size = 0x12000, scoped, tag = 'internal scratch']
  %s0 = inlined_call_operand.hbm [shape: f32[16,128], index: 0, kind: input, shape index: {}]
  %s1 = inlined_call_operand.hbm [shape: bf16[128,128], index: 1, kind: input, shape index: {}]
  %s2 = inlined_call_operand.vmem [shape: f32[1,128], index: 2, kind: input, shape index: {}]
  %s3 = inlined_call_operand.hbm [shape: bf16[128,128], index: 3, kind: input, shape index: {}]
  %s4 = inlined_call_operand.vmem [shape: f32[1,128], index: 4, kind: input, shape index: {}]
  %s5 = inlined_call_operand.hbm [shape: bf16[128,128], index: 5, kind: input, shape index: {}]
  %s6 = inlined_call_operand.vmem [shape: f32[1,128], index: 6, kind: input, shape index: {}]
  %s7 = inlined_call_operand.hbm [shape: f32[16,128], index: 7, kind: output, shape index: {}]
  %s8 = sld [smem:[#allocation0]]
  $region54: #{tpu_custom_call.1} parent=0
    _
  %s10 = ssub.s32 1, %s8
  %s11 = scalar_select 0, %s10, %s8
  $region1: #{tpu_custom_call.1} parent=0
    #allocation2 [shape = 'u8[8192]{0}', space=vmem, size = 0x2000, scoped, tag = 'input window, operand 0, single buffered']
    #allocation3 [shape = 's32[1]{0}', space=sflag, size = 0x4, scoped, tag = 'scoped memory for tpu_custom_call.1']
    #allocation4 [shape = 's32[1]{0}', space=sflag, size = 0x4, scoped, tag = 'scoped memory for tpu_custom_call.1']
    #allocation5 [shape = 'u8[32768]{0}', space=vmem, size = 0x8000, scoped, tag = 'input window, operand 1, single buffered']
    #allocation6 [shape = 's32[1]{0}', space=sflag, size = 0x4, scoped, tag = 'scoped memory for tpu_custom_call.1']
    #allocation7 [shape = 'u8[32768]{0}', space=vmem, size = 0x8000, scoped, tag = 'input window, operand 3, single buffered']
    #allocation8 [shape = 'u8[32768]{0}', space=vmem, size = 0x8000, scoped, tag = 'input window, operand 5, single buffered']
    #allocation9 [shape = 's32[1]{0}', space=sflag, size = 0x4, scoped, tag = 'scoped memory for tpu_custom_call.1']
    #allocation10 [shape = 'u8[8192]{0}', space=vmem, size = 0x2000, scoped, tag = 'output window, operand 0, single buffered']
    %12 = vsyncpa [#allocation3], 0
    %13 = vsyncpa [#allocation6], 0
    %14 = vsyncpa [#allocation9], 0
    %15 = vsyncpa [#allocation4], 0
    // Predicated region
    $region2: #{tpu_custom_call.1} parent=1 // pred_check
      _
    $region3: #{tpu_custom_call.1} parent=1 // pred_check_branch
      %17 = sbr.rel (0) target = $region5
    $region4: #{tpu_custom_call.1} parent=1 // pred_region
      %s19 = ssub.s32 256, 256
      %20 = vsyncadd [#allocation3], %s19
      %s21 = sshll.u32 [#allocation2], 4
      %s22 = int_to_ptr.vmem [resolvable:$true] %s21
      %27 = dma.hbm_to_vmem [thread:$0]  %s0, 256, %s22, [#allocation3], 128, 128, 8
    $region5: #{tpu_custom_call.1} parent=1 // pred_fallthru
      _
    // Predicated region
    $region6: #{tpu_custom_call.1} parent=1 // pred_check
      _
    $region7: #{tpu_custom_call.1} parent=1 // pred_check_branch
      %29 = sbr.rel (0) target = $region9
    $region8: #{tpu_custom_call.1} parent=1 // pred_region
      %s31 = ssub.s32 1024, 1024
      %32 = vsyncadd [#allocation6], %s31
      %s33 = sshll.u32 [#allocation5], 4
      %s34 = int_to_ptr.vmem [resolvable:$true] %s33
      %39 = dma.hbm_to_vmem [thread:$0]  %s1, 1024, %s34, [#allocation6], 64, 64, 4
    $region9: #{tpu_custom_call.1} parent=1 // pred_fallthru
      _
    // Predicated region
    $region10: #{tpu_custom_call.1} parent=1 // pred_check
      _
    $region11: #{tpu_custom_call.1} parent=1 // pred_check_branch
      %41 = sbr.rel (0) target = $region13
    $region12: #{tpu_custom_call.1} parent=1 // pred_region
      _
    $region13: #{tpu_custom_call.1} parent=1 // pred_fallthru
      _
    // Predicated region
    $region14: #{tpu_custom_call.1} parent=1 // pred_check
      _
    $region15: #{tpu_custom_call.1} parent=1 // pred_check_branch
      %43 = sbr.rel (0) target = $region17
    $region16: #{tpu_custom_call.1} parent=1 // pred_region
      %s45 = ssub.s32 1024, 1024
      %46 = vsyncadd [#allocation6], %s45
      %s47 = sshll.u32 [#allocation7], 4
      %s48 = int_to_ptr.vmem [resolvable:$true] %s47
      %53 = dma.hbm_to_vmem [thread:$0]  %s3, 1024, %s48, [#allocation6], 64, 64, 4
    $region17: #{tpu_custom_call.1} parent=1 // pred_fallthru
      _
    // Predicated region
    $region18: #{tpu_custom_call.1} parent=1 // pred_check
      _
    $region19: #{tpu_custom_call.1} parent=1 // pred_check_branch
      %55 = sbr.rel (0) target = $region21
    $region20: #{tpu_custom_call.1} parent=1 // pred_region
      _
    $region21: #{tpu_custom_call.1} parent=1 // pred_fallthru
      _
    // Predicated region
    $region22: #{tpu_custom_call.1} parent=1 // pred_check
      _
    $region23: #{tpu_custom_call.1} parent=1 // pred_check_branch
      %57 = sbr.rel (0) target = $region25
    $region24: #{tpu_custom_call.1} parent=1 // pred_region
      %s59 = ssub.s32 1024, 1024
      %60 = vsyncadd [#allocation9], %s59
      %s61 = sshll.u32 [#allocation8], 4
      %s62 = int_to_ptr.vmem [resolvable:$true] %s61
      %67 = dma.hbm_to_vmem [thread:$0]  %s5, 1024, %s62, [#allocation9], 64, 64, 4
    $region25: #{tpu_custom_call.1} parent=1 // pred_fallthru
      _
    // Predicated region
    $region26: #{tpu_custom_call.1} parent=1 // pred_check
      _
    $region27: #{tpu_custom_call.1} parent=1 // pred_check_branch
      %69 = sbr.rel (0) target = $region29
    $region28: #{tpu_custom_call.1} parent=1 // pred_region
      _
    $region29: #{tpu_custom_call.1} parent=1 // pred_fallthru
      _
    // Predicated region
    $region30: #{tpu_custom_call.1} parent=1 // pred_check
      _
    $region31: #{tpu_custom_call.1} parent=1 // pred_check_branch
      %71 = sbr.rel (0) target = $region33
    $region32: #{tpu_custom_call.1} parent=1 // pred_region
      %72 = dma.done [#allocation3], 256
    $region33: #{tpu_custom_call.1} parent=1 // pred_fallthru
      _
    // Predicated region
    $region34: #{tpu_custom_call.1} parent=1 // pred_check
      _
    $region35: #{tpu_custom_call.1} parent=1 // pred_check_branch
      %74 = sbr.rel (0) target = $region37
    $region36: #{tpu_custom_call.1} parent=1 // pred_region
      %75 = dma.done [#allocation6], 1024
    $region37: #{tpu_custom_call.1} parent=1 // pred_fallthru
      _
    // Predicated region
    $region38: #{tpu_custom_call.1} parent=1 // pred_check
      _
    $region39: #{tpu_custom_call.1} parent=1 // pred_check_branch
      %77 = sbr.rel (0) target = $region41
    $region40: #{tpu_custom_call.1} parent=1 // pred_region
      %78 = dma.done [#allocation6], 1024
    $region41: #{tpu_custom_call.1} parent=1 // pred_fallthru
      _
    // Predicated region
    $region42: #{tpu_custom_call.1} parent=1 // pred_check
      _
    $region43: #{tpu_custom_call.1} parent=1 // pred_check_branch
      %80 = sbr.rel (0) target = $region45
    $region44: #{tpu_custom_call.1} parent=1 // pred_region
      %81 = dma.done [#allocation9], 1024
    $region45: #{tpu_custom_call.1} parent=1 // pred_fallthru
      _
    %v83 = vld [vmem:[#allocation2] sm:$0xff]
    %v84 = vld [vmem:[#allocation2 + $0x8] sm:$0xff]
    %v85 = vpack.c.bf16 %v84, %v83
    %v86 = vld [vmem:[#allocation5] sm:$0xf]
    %v87 = vld [vmem:[#allocation5 + $0x4] sm:$0xf]
    %v88 = vld [vmem:[#allocation5 + $0x8] sm:$0xf]
    %v89 = vld [vmem:[#allocation5 + $0xc] sm:$0xf]
    %v90 = vld [vmem:[#allocation5 + $0x10] sm:$0xf]
    %v91 = vld [vmem:[#allocation5 + $0x14] sm:$0xf]
    %v92 = vld [vmem:[#allocation5 + $0x18] sm:$0xf]
    %v93 = vld [vmem:[#allocation5 + $0x1c] sm:$0xf]
    %v94 = vld [vmem:[#allocation5 + $0x20] sm:$0xf]
    %v95 = vld [vmem:[#allocation5 + $0x24] sm:$0xf]
    %v96 = vld [vmem:[#allocation5 + $0x28] sm:$0xf]
    %v97 = vld [vmem:[#allocation5 + $0x2c] sm:$0xf]
    %v98 = vld [vmem:[#allocation5 + $0x30] sm:$0xf]
    %v99 = vld [vmem:[#allocation5 + $0x34] sm:$0xf]
    %v100 = vld [vmem:[#allocation5 + $0x38] sm:$0xf]
    %v101 = vld [vmem:[#allocation5 + $0x3c] sm:$0xf]
    %v102 = vld [vmem:[%s2] sm:$0x1]
    %v104 = vlaneseq
    %v105 = vshrl.u32 %v104, 7
    %v106 = vsub.s32 0, %v105
    %v107 = vrot.slane %v102, %v106
    %v125 = vunpack.c.l.b16 %v86
    %v126 = vunpack.c.l.b16 %v87
    %v127 = vunpack.c.l.b16 %v88
    %v128 = vunpack.c.l.b16 %v89
    %v129 = vunpack.c.l.b16 %v90
    %v130 = vunpack.c.l.b16 %v91
    %v131 = vunpack.c.l.b16 %v92
    %v132 = vunpack.c.l.b16 %v93
    %v133 = vunpack.c.l.b16 %v94
    %v134 = vunpack.c.l.b16 %v95
    %v135 = vunpack.c.l.b16 %v96
    %v136 = vunpack.c.l.b16 %v97
    %v137 = vunpack.c.l.b16 %v98
    %v138 = vunpack.c.l.b16 %v99
    %v139 = vunpack.c.l.b16 %v100
    %v140 = vunpack.c.l.b16 %v101
    %v141 = vpack.c.b16 %v126, %v125
    %v142 = vpack.c.b16 %v128, %v127
    %v143 = vpack.c.b16 %v130, %v129
    %v144 = vpack.c.b16 %v132, %v131
    %v145 = vpack.c.b16 %v134, %v133
    %v146 = vpack.c.b16 %v136, %v135
    %v147 = vpack.c.b16 %v138, %v137
    %v148 = vpack.c.b16 %v140, %v139
    %157 = vmatprep.subr.bf16.mxu0 0
    %158 = vmatpush1.bf16.msra.mxu0 %v141
    %159 = vmatprep.subr.bf16.mxu0 0
    %160 = vmatpush1.bf16.msra.mxu0 %v142
    %161 = vmatprep.subr.bf16.mxu0 0
    %162 = vmatpush1.bf16.msra.mxu0 %v143
    %163 = vmatprep.subr.bf16.mxu0 0
    %164 = vmatpush1.bf16.msra.mxu0 %v144
    %165 = vmatprep.subr.bf16.mxu0 0
    %166 = vmatpush1.bf16.msra.mxu0 %v145
    %167 = vmatprep.subr.bf16.mxu0 0
    %168 = vmatpush1.bf16.msra.mxu0 %v146
    %169 = vmatprep.subr.bf16.mxu0 0
    %170 = vmatpush1.bf16.msra.mxu0 %v147
    %171 = vmatprep.subr.bf16.mxu0 0
    %172 = vmatpush1.bf16.msra.mxu0 %v148
    %173 = vmatprep.subr.bf16.mxu0 0
    %174 = vmatpush1.bf16.msra.mxu0 0
    %175 = vmatprep.subr.bf16.mxu0 0
    %176 = vmatpush1.bf16.msra.mxu0 0
    %177 = vmatprep.subr.bf16.mxu0 0
    %178 = vmatpush1.bf16.msra.mxu0 0
    %179 = vmatprep.subr.bf16.mxu0 0
    %180 = vmatpush1.bf16.msra.mxu0 0
    %181 = vmatprep.subr.bf16.mxu0 0
    %182 = vmatpush1.bf16.msra.mxu0 0
    %183 = vmatprep.subr.bf16.mxu0 0
    %184 = vmatpush1.bf16.msra.mxu0 0
    %185 = vmatprep.subr.bf16.mxu0 0
    %186 = vmatpush1.bf16.msra.mxu0 0
    %187 = vmatprep.subr.bf16.mxu0 0
    %188 = vmatpush1.bf16.msra.mxu0 0
    %189 = vmatprep.mubr.bf16.mxu0 0
    %190 = vmatmul.mubr.bf16.gmra.mrb[0].mxu0 %v85
    %v191 = vpop.f32.mrb[0].mxu0
    %v192 = vadd.f32 %v107, %v191
    %v193 = vpop.f32.mrb[0].mxu0
    %v194 = vpop.f32.mrb[0].mxu0
    %v195 = vadd.f32 %v107, %v194
    %v196 = vpop.f32.mrb[0].mxu0
    %197 = vdwg.mxu0
    %vm198 = vcmp.gt.f32.partialorder %v192, 0.0
    %vm199 = vcmp.gt.f32.partialorder %v195, 0.0
    %v200 = vmul.f32 %v192, 0.2
    %v201 = vmul.f32 %v195, 0.2
    %v202 = vsel %vm198, %v192, %v200
    %v203 = vsel %vm199, %v195, %v201
    %v204 = vpack.c.bf16 %v203, %v202
    %v205 = vld [vmem:[#allocation7] sm:$0xf]
    %v206 = vld [vmem:[#allocation7 + $0x4] sm:$0xf]
    %v207 = vld [vmem:[#allocation7 + $0x8] sm:$0xf]
    %v208 = vld [vmem:[#allocation7 + $0xc] sm:$0xf]
    %v209 = vld [vmem:[#allocation7 + $0x10] sm:$0xf]
    %v210 = vld [vmem:[#allocation7 + $0x14] sm:$0xf]
    %v211 = vld [vmem:[#allocation7 + $0x18] sm:$0xf]
    %v212 = vld [vmem:[#allocation7 + $0x1c] sm:$0xf]
    %v213 = vld [vmem:[#allocation7 + $0x20] sm:$0xf]
    %v214 = vld [vmem:[#allocation7 + $0x24] sm:$0xf]
    %v215 = vld [vmem:[#allocation7 + $0x28] sm:$0xf]
    %v216 = vld [vmem:[#allocation7 + $0x2c] sm:$0xf]
    %v217 = vld [vmem:[#allocation7 + $0x30] sm:$0xf]
    %v218 = vld [vmem:[#allocation7 + $0x34] sm:$0xf]
    %v219 = vld [vmem:[#allocation7 + $0x38] sm:$0xf]
    %v220 = vld [vmem:[#allocation7 + $0x3c] sm:$0xf]
    %v221 = vld [vmem:[%s4] sm:$0x1]
    %v223 = vlaneseq
    %v224 = vshrl.u32 %v223, 7
    %v225 = vsub.s32 0, %v224
    %v226 = vrot.slane %v221, %v225
    %v244 = vunpack.c.l.b16 %v205
    %v245 = vunpack.c.l.b16 %v206
    %v246 = vunpack.c.l.b16 %v207
    %v247 = vunpack.c.l.b16 %v208
    %v248 = vunpack.c.l.b16 %v209
    %v249 = vunpack.c.l.b16 %v210
    %v250 = vunpack.c.l.b16 %v211
    %v251 = vunpack.c.l.b16 %v212
    %v252 = vunpack.c.l.b16 %v213
    %v253 = vunpack.c.l.b16 %v214
    %v254 = vunpack.c.l.b16 %v215
    %v255 = vunpack.c.l.b16 %v216
    %v256 = vunpack.c.l.b16 %v217
    %v257 = vunpack.c.l.b16 %v218
    %v258 = vunpack.c.l.b16 %v219
    %v259 = vunpack.c.l.b16 %v220
    %v260 = vpack.c.b16 %v245, %v244
    %v261 = vpack.c.b16 %v247, %v246
    %v262 = vpack.c.b16 %v249, %v248
    %v263 = vpack.c.b16 %v251, %v250
    %v264 = vpack.c.b16 %v253, %v252
    %v265 = vpack.c.b16 %v255, %v254
    %v266 = vpack.c.b16 %v257, %v256
    %v267 = vpack.c.b16 %v259, %v258
    %276 = vmatprep.subr.bf16.mxu0 0
    %277 = vmatpush1.bf16.msra.mxu0 %v260
    %278 = vmatprep.subr.bf16.mxu0 0
    %279 = vmatpush1.bf16.msra.mxu0 %v261
    %280 = vmatprep.subr.bf16.mxu0 0
    %281 = vmatpush1.bf16.msra.mxu0 %v262
    %282 = vmatprep.subr.bf16.mxu0 0
    %283 = vmatpush1.bf16.msra.mxu0 %v263
    %284 = vmatprep.subr.bf16.mxu0 0
    %285 = vmatpush1.bf16.msra.mxu0 %v264
    %286 = vmatprep.subr.bf16.mxu0 0
    %287 = vmatpush1.bf16.msra.mxu0 %v265
    %288 = vmatprep.subr.bf16.mxu0 0
    %289 = vmatpush1.bf16.msra.mxu0 %v266
    %290 = vmatprep.subr.bf16.mxu0 0
    %291 = vmatpush1.bf16.msra.mxu0 %v267
    %292 = vmatprep.subr.bf16.mxu0 0
    %293 = vmatpush1.bf16.msra.mxu0 0
    %294 = vmatprep.subr.bf16.mxu0 0
    %295 = vmatpush1.bf16.msra.mxu0 0
    %296 = vmatprep.subr.bf16.mxu0 0
    %297 = vmatpush1.bf16.msra.mxu0 0
    %298 = vmatprep.subr.bf16.mxu0 0
    %299 = vmatpush1.bf16.msra.mxu0 0
    %300 = vmatprep.subr.bf16.mxu0 0
    %301 = vmatpush1.bf16.msra.mxu0 0
    %302 = vmatprep.subr.bf16.mxu0 0
    %303 = vmatpush1.bf16.msra.mxu0 0
    %304 = vmatprep.subr.bf16.mxu0 0
    %305 = vmatpush1.bf16.msra.mxu0 0
    %306 = vmatprep.subr.bf16.mxu0 0
    %307 = vmatpush1.bf16.msra.mxu0 0
    %308 = vmatprep.mubr.bf16.mxu0 0
    %309 = vmatmul.mubr.bf16.gmra.mrb[0].mxu0 %v204
    %v310 = vpop.f32.mrb[0].mxu0
    %v311 = vadd.f32 %v226, %v310
    %v312 = vpop.f32.mrb[0].mxu0
    %v313 = vpop.f32.mrb[0].mxu0
    %v314 = vadd.f32 %v226, %v313
    %v315 = vpop.f32.mrb[0].mxu0
    %316 = vdwg.mxu0
    %vm317 = vcmp.gt.f32.partialorder %v311, 0.0
    %vm318 = vcmp.gt.f32.partialorder %v314, 0.0
    %v319 = vmul.f32 %v311, 0.2
    %v320 = vmul.f32 %v314, 0.2
    %v321 = vsel %vm317, %v311, %v319
    %v322 = vsel %vm318, %v314, %v320
    %v323 = vpack.c.bf16 %v322, %v321
    %v324 = vld [vmem:[#allocation8] sm:$0xf]
    %v325 = vld [vmem:[#allocation8 + $0x4] sm:$0xf]
    %v326 = vld [vmem:[#allocation8 + $0x8] sm:$0xf]
    %v327 = vld [vmem:[#allocation8 + $0xc] sm:$0xf]
    %v328 = vld [vmem:[#allocation8 + $0x10] sm:$0xf]
    %v329 = vld [vmem:[#allocation8 + $0x14] sm:$0xf]
    %v330 = vld [vmem:[#allocation8 + $0x18] sm:$0xf]
    %v331 = vld [vmem:[#allocation8 + $0x1c] sm:$0xf]
    %v332 = vld [vmem:[#allocation8 + $0x20] sm:$0xf]
    %v333 = vld [vmem:[#allocation8 + $0x24] sm:$0xf]
    %v334 = vld [vmem:[#allocation8 + $0x28] sm:$0xf]
    %v335 = vld [vmem:[#allocation8 + $0x2c] sm:$0xf]
    %v336 = vld [vmem:[#allocation8 + $0x30] sm:$0xf]
    %v337 = vld [vmem:[#allocation8 + $0x34] sm:$0xf]
    %v338 = vld [vmem:[#allocation8 + $0x38] sm:$0xf]
    %v339 = vld [vmem:[#allocation8 + $0x3c] sm:$0xf]
    %v340 = vld [vmem:[%s6] sm:$0x1]
    %v342 = vlaneseq
    %v343 = vshrl.u32 %v342, 7
    %v344 = vsub.s32 0, %v343
    %v345 = vrot.slane %v340, %v344
    %v363 = vunpack.c.l.b16 %v324
    %v364 = vunpack.c.l.b16 %v325
    %v365 = vunpack.c.l.b16 %v326
    %v366 = vunpack.c.l.b16 %v327
    %v367 = vunpack.c.l.b16 %v328
    %v368 = vunpack.c.l.b16 %v329
    %v369 = vunpack.c.l.b16 %v330
    %v370 = vunpack.c.l.b16 %v331
    %v371 = vunpack.c.l.b16 %v332
    %v372 = vunpack.c.l.b16 %v333
    %v373 = vunpack.c.l.b16 %v334
    %v374 = vunpack.c.l.b16 %v335
    %v375 = vunpack.c.l.b16 %v336
    %v376 = vunpack.c.l.b16 %v337
    %v377 = vunpack.c.l.b16 %v338
    %v378 = vunpack.c.l.b16 %v339
    %v379 = vpack.c.b16 %v364, %v363
    %v380 = vpack.c.b16 %v366, %v365
    %v381 = vpack.c.b16 %v368, %v367
    %v382 = vpack.c.b16 %v370, %v369
    %v383 = vpack.c.b16 %v372, %v371
    %v384 = vpack.c.b16 %v374, %v373
    %v385 = vpack.c.b16 %v376, %v375
    %v386 = vpack.c.b16 %v378, %v377
    %395 = vmatprep.subr.bf16.mxu0 0
    %396 = vmatpush1.bf16.msra.mxu0 %v379
    %397 = vmatprep.subr.bf16.mxu0 0
    %398 = vmatpush1.bf16.msra.mxu0 %v380
    %399 = vmatprep.subr.bf16.mxu0 0
    %400 = vmatpush1.bf16.msra.mxu0 %v381
    %401 = vmatprep.subr.bf16.mxu0 0
    %402 = vmatpush1.bf16.msra.mxu0 %v382
    %403 = vmatprep.subr.bf16.mxu0 0
    %404 = vmatpush1.bf16.msra.mxu0 %v383
    %405 = vmatprep.subr.bf16.mxu0 0
    %406 = vmatpush1.bf16.msra.mxu0 %v384
    %407 = vmatprep.subr.bf16.mxu0 0
    %408 = vmatpush1.bf16.msra.mxu0 %v385
    %409 = vmatprep.subr.bf16.mxu0 0
    %410 = vmatpush1.bf16.msra.mxu0 %v386
    %411 = vmatprep.subr.bf16.mxu0 0
    %412 = vmatpush1.bf16.msra.mxu0 0
    %413 = vmatprep.subr.bf16.mxu0 0
    %414 = vmatpush1.bf16.msra.mxu0 0
    %415 = vmatprep.subr.bf16.mxu0 0
    %416 = vmatpush1.bf16.msra.mxu0 0
    %417 = vmatprep.subr.bf16.mxu0 0
    %418 = vmatpush1.bf16.msra.mxu0 0
    %419 = vmatprep.subr.bf16.mxu0 0
    %420 = vmatpush1.bf16.msra.mxu0 0
    %421 = vmatprep.subr.bf16.mxu0 0
    %422 = vmatpush1.bf16.msra.mxu0 0
    %423 = vmatprep.subr.bf16.mxu0 0
    %424 = vmatpush1.bf16.msra.mxu0 0
    %425 = vmatprep.subr.bf16.mxu0 0
    %426 = vmatpush1.bf16.msra.mxu0 0
    %427 = vmatprep.mubr.bf16.mxu0 0
    %428 = vmatmul.mubr.bf16.gmra.mrb[0].mxu0 %v323
    %v429 = vpop.f32.mrb[0].mxu0
    %v430 = vadd.f32 %v345, %v429
    %v431 = vpop.f32.mrb[0].mxu0
    %v432 = vpop.f32.mrb[0].mxu0
    %v433 = vadd.f32 %v345, %v432
    %v434 = vpop.f32.mrb[0].mxu0
    %435 = vdwg.mxu0
    %v436 = vtanh.pop %v430
    %v437 = vtanh.pop %v433
    %438 = vst [vmem:[#allocation10] sm:$0xff] %v436
    %439 = vst [vmem:[#allocation10 + $0x8] sm:$0xff] %v437
    // Predicated region
    $region46: #{tpu_custom_call.1} parent=1 // pred_check
      _
    $region47: #{tpu_custom_call.1} parent=1 // pred_check_branch
      %441 = sbr.rel (0) target = $region49
    $region48: #{tpu_custom_call.1} parent=1 // pred_region
      %s443 = ssub.s32 256, 256
      %444 = vsyncadd [#allocation4], %s443
      %s445 = sshll.u32 [#allocation10], 4
      %s446 = int_to_ptr.vmem [resolvable:$true] %s445
      %451 = dma.vmem_to_hbm [thread:$0]  %s446, 256, %s7, [#allocation4], 128, 128, 8
    $region49: #{tpu_custom_call.1} parent=1 // pred_fallthru
      _
    // Predicated region
    $region50: #{tpu_custom_call.1} parent=1 // pred_check
      _
    $region51: #{tpu_custom_call.1} parent=1 // pred_check_branch
      %453 = sbr.rel (0) target = $region53
    $region52: #{tpu_custom_call.1} parent=1 // pred_region
      %454 = dma.done [#allocation4], 256
    $region53: #{tpu_custom_call.1} parent=1 // pred_fallthru
      _
    %455 = vsyncpa [#allocation3], 1
    %456 = vsyncpa [#allocation6], 1
    %457 = vsyncpa [#allocation9], 1
    %458 = vsyncpa [#allocation4], 1

</llo_original>
